<compile_context>
chip_gen: v5e
topology: v5e:2x2
jax: 0.10.0
libtpu: 0.0.40
codegen_flags: <defaults>
</compile_context>

<pallas_src>
import functools

import numpy as np
import jax
import jax.numpy as jnp
from jax.experimental import pallas as pl
from jax.experimental.pallas import tpu as pltpu


def _actor_kernel(log_std_min, log_std_max, action_dim, out_width,
                  feats_ref, noise_ref,
                  w1_ref, b1_ref, w2_ref, b2_ref, w3_ref, b3_ref,
                  out_ref):
    A = action_dim

    # Trunk MLP. Matmul operands stay in the streamed dtype (f32 or bf16) with f32
    # accumulation on the MXU; all elementwise math stays f32 (v5e has no bf16 VPU/EUP).
    h = jnp.dot(feats_ref[...], w1_ref[...], preferred_element_type=jnp.float32)
    h = jnp.maximum(h + b1_ref[...], 0.0)
    h = jnp.dot(h.astype(w2_ref.dtype), w2_ref[...], preferred_element_type=jnp.float32)
    h = jnp.maximum(h + b2_ref[...], 0.0)

    # Single fused head matmul -> (TB, 2A); split mu / log_std with static lane slices
    # (== torch .chunk(2, dim=-1)).
    head = jnp.dot(h.astype(w3_ref.dtype), w3_ref[...], preferred_element_type=jnp.float32)
    head = head + b3_ref[...]
    mu = head[:, :A]
    log_std = head[:, A:]

    log_std = jnp.tanh(log_std)
    log_std = log_std_min + 0.5 * (log_std_max - log_std_min) * (log_std + 1.0)
    std = jnp.exp(log_std)

    noise = noise_ref[...].astype(jnp.float32)
    pi = mu + noise * std

    # gaussian_logprob(noise, log_std)
    residual = jnp.sum(-0.5 * noise * noise - log_std, axis=-1, keepdims=True)
    log_pi = residual - 0.5 * np.log(2.0 * np.pi) * A

    # squash(mu, pi, log_pi)
    mu_t = jnp.tanh(mu)
    pi_t = jnp.tanh(pi)
    log_pi = log_pi - jnp.sum(
        jnp.log(jnp.maximum(1.0 - pi_t * pi_t, 0.0) + 1e-6), axis=-1, keepdims=True)

    # Pack all four outputs into one lane-dense slab written with a single store /
    # one output DMA per grid step: [mu | pi | log_std | log_pi | zero-pad].
    tb = mu_t.shape[0]
    pieces = [mu_t, pi_t, log_std, log_pi]
    pad = out_width - (3 * A + 1)
    if pad > 0:
        pieces.append(jnp.zeros((tb, pad), jnp.float32))
    out_ref[...] = jnp.concatenate(pieces, axis=-1).astype(out_ref.dtype)


def _round_up(x, m):
    return ((x + m - 1) // m) * m


def actor_forward(feats, noise, params, log_std_min, log_std_max, *,
                  tile_b=512, matmul_dtype=None):
    """Fused MOOSS Actor head.

    feats: (B, F) encoder features; noise: (B, A) standard-normal samples (the
    equivalent of torch.randn_like(mu), drawn in the wrapper for determinism).
    Returns (mu, pi, log_pi, log_std) with PyTorch Actor.forward semantics
    (compute_pi=True, compute_log_pi=True).

    matmul_dtype=jnp.bfloat16 streams feats / W1 / W2 / W3 as bf16 (halves HBM
    traffic and runs the bf16 MXU at full rate on v6e/v7x) while keeping f32
    accumulation and f32 elementwise math.
    """
    B, F = feats.shape
    A = noise.shape[-1]
    res_dtype = feats.dtype

    w1, b1 = params["w1"], params["b1"]
    w2, b2 = params["w2"], params["b2"]
    w3, b3 = params["w3"], params["b3"]
    H = w1.shape[1]
    assert w3.shape == (H, 2 * A)

    if matmul_dtype is not None:
        feats = feats.astype(matmul_dtype)
        w1 = w1.astype(matmul_dtype)
        w2 = w2.astype(matmul_dtype)
        w3 = w3.astype(matmul_dtype)

    # Biases are broadcast-added after the f32 accumulation -> keep them f32.
    b1 = b1.reshape(1, H).astype(jnp.float32)
    b2 = b2.reshape(1, H).astype(jnp.float32)
    b3 = b3.reshape(1, 2 * A).astype(jnp.float32)

    # Batch tiling. No wrapper-side padding: grid = ceil(B / TB) and Pallas clips the
    # ragged last block (reads past B are don't-care, writes past B are dropped).
    # Use >= 2 grid steps whenever possible so dimension_semantics=("parallel",)
    # actually shards the batch across v7x's two TensorCores.
    if B <= 8:
        TB = B
    else:
        TB = min(tile_b, _round_up(pl.cdiv(B, 2), 8))
    grid = (pl.cdiv(B, TB),)

    # Single lane-dense packed output: [mu | pi | log_std | log_pi | pad] per row.
    OUT_W = _round_up(3 * A + 1, 128)

    # Weights have a constant index_map -> single buffer (no redundant double-buffer).
    def wspec(shape):
        return pl.BlockSpec(shape, lambda i: (0, 0), pipeline_mode=pl.Buffered(1))

    def bspec(d):
        return pl.BlockSpec((TB, d), lambda i: (i, 0))

    # Explicit scoped-VMEM budget (matters most on v7x: 64 MiB physical, 32 MiB default).
    in_item = jnp.dtype(feats.dtype).itemsize
    w_item = jnp.dtype(w1.dtype).itemsize
    weight_bytes = (w1.size + w2.size + w3.size) * w_item + (b1.size + b2.size + b3.size) * 4
    stream_bytes = 2 * TB * (F * in_item + A * 4)        # double-buffered feats/noise blocks
    out_bytes = 2 * TB * OUT_W * 4                        # double-buffered packed output
    temp_bytes = 6 * TB * H * 4                           # f32 intermediates headroom
    vmem_limit = int(min(56 * 1024 * 1024,
                         max(32 * 1024 * 1024,
                             2 * (weight_bytes + stream_bytes + out_bytes + temp_bytes))))

    kernel = functools.partial(
        _actor_kernel, float(log_std_min), float(log_std_max), A, OUT_W)

    packed = pl.pallas_call(
        kernel,
        out_shape=jax.ShapeDtypeStruct((B, OUT_W), jnp.float32),
        grid_spec=pltpu.PrefetchScalarGridSpec(
            num_scalar_prefetch=0,
            grid=grid,
            in_specs=[
                bspec(F),                               # feats
                bspec(A),                               # noise
                wspec((F, H)), wspec((1, H)),           # W1, b1
                wspec((H, H)), wspec((1, H)),           # W2, b2
                wspec((H, 2 * A)), wspec((1, 2 * A)),   # W3, b3 (kept whole)
            ],
            out_specs=pl.BlockSpec((TB, OUT_W), lambda i: (i, 0)),
        ),
        compiler_params=pltpu.CompilerParams(
            dimension_semantics=("parallel",),
            vmem_limit_bytes=vmem_limit,
        ),
    )(feats, noise, w1, b1, w2, b2, w3, b3)

    mu = packed[:, 0:A].astype(res_dtype)
    pi = packed[:, A:2 * A].astype(res_dtype)
    log_std = packed[:, 2 * A:3 * A].astype(res_dtype)
    log_pi = packed[:, 3 * A:3 * A + 1]
    return mu, pi, log_pi, log_std


if __name__ == "__main__":
    key = jax.random.PRNGKey(0)
    k_obs, k_noise, k1, k2, k3 = jax.random.split(key, 5)

    encoder_feature_dim = 64
    hidden_dim = 128
    action_dim = 6
    log_std_min, log_std_max = -10.0, 2.0

    def linear_init(k, fan_in, fan_out):
        w = jax.random.normal(k, (fan_in, fan_out), jnp.float32) / jnp.sqrt(fan_in)
        b = jnp.zeros((fan_out,), jnp.float32)
        return w, b

    w1, b1 = linear_init(k1, encoder_feature_dim, hidden_dim)
    w2, b2 = linear_init(k2, hidden_dim, hidden_dim)
    w3, b3 = linear_init(k3, hidden_dim, 2 * action_dim)
    params = dict(w1=w1, b1=b1, w2=w2, b2=b2, w3=w3, b3=b3)

    def reference(feats, noise, matmul_dtype):
        def dot(a, w):
            return jnp.dot(a.astype(matmul_dtype), w.astype(matmul_dtype),
                           preferred_element_type=jnp.float32)
        h = jnp.maximum(dot(feats, w1) + b1, 0.0)
        h = jnp.maximum(dot(h, w2) + b2, 0.0)
        out = dot(h, w3) + b3
        mu_r, log_std_r = out[:, :action_dim], out[:, action_dim:]
        log_std_r = jnp.tanh(log_std_r)
        log_std_r = log_std_min + 0.5 * (log_std_max - log_std_min) * (log_std_r + 1.0)
        std_r = jnp.exp(log_std_r)
        pi_r = mu_r + noise * std_r
        residual = jnp.sum(-0.5 * noise ** 2 - log_std_r, axis=-1, keepdims=True)
        log_pi_r = residual - 0.5 * np.log(2.0 * np.pi) * action_dim
        mu_rt, pi_rt = jnp.tanh(mu_r), jnp.tanh(pi_r)
        log_pi_r = log_pi_r - jnp.sum(
            jnp.log(jnp.maximum(1.0 - pi_rt ** 2, 0.0) + 1e-6), axis=-1, keepdims=True)
        return mu_rt, pi_rt, log_pi_r, log_std_r

    def check(B, matmul_dtype, atol, atol_lp):
        feats = jax.random.normal(jax.random.fold_in(k_obs, B),
                                  (B, encoder_feature_dim), jnp.float32)
        noise = jax.random.normal(jax.random.fold_in(k_noise, B),
                                  (B, action_dim), jnp.float32)
        mu, pi, log_pi, log_std = jax.block_until_ready(
            actor_forward(feats, noise, params, log_std_min, log_std_max,
                          matmul_dtype=matmul_dtype))
        assert mu.shape == (B, action_dim) and pi.shape == (B, action_dim)
        assert log_pi.shape == (B, 1) and log_std.shape == (B, action_dim)
        mu_r, pi_r, log_pi_r, log_std_r = reference(
            feats, noise, matmul_dtype or jnp.float32)
        assert jnp.allclose(mu, mu_r, atol=atol, rtol=atol)
        assert jnp.allclose(pi, pi_r, atol=atol, rtol=atol)
        assert jnp.allclose(log_std, log_std_r, atol=atol, rtol=atol)
        assert jnp.allclose(log_pi, log_pi_r, atol=atol_lp, rtol=atol_lp)

    # f32 path, single tiny block (B=2) — tight check vs. the PyTorch-equivalent math.
    check(2, None, 1e-5, 1e-4)
    # f32 path, multi-step grid with a ragged last block (exercises megacore split + clipping).
    check(20, None, 1e-5, 1e-4)
    # bf16-streamed matmuls (v6e/v7x perf mode) vs. a bf16-matmul reference.
    check(2, jnp.bfloat16, 2e-3, 1e-2)

    print("KERNEL_OK")
</pallas_src>

<mosaic_0001>
module attributes {stable_mosaic.version = 11 : i64} {
  func.func @_actor_kernel(%arg0: i32, %arg1: memref<2x64xf32, #tpu.memory_space<vmem>>, %arg2: memref<2x6xf32, #tpu.memory_space<vmem>>, %arg3: memref<64x128xf32, #tpu.memory_space<vmem>>, %arg4: memref<1x128xf32, #tpu.memory_space<vmem>>, %arg5: memref<128x128xf32, #tpu.memory_space<vmem>>, %arg6: memref<1x128xf32, #tpu.memory_space<vmem>>, %arg7: memref<128x12xf32, #tpu.memory_space<vmem>>, %arg8: memref<1x12xf32, #tpu.memory_space<vmem>>, %arg9: memref<2x128xf32, #tpu.memory_space<vmem>>) attributes {dimension_semantics = [#tpu.dimension_semantics<parallel>], iteration_bounds = array<i64: 1>, scalar_prefetch = 0 : i64, scratch_operands = 0 : i64, tpu.core_type = #tpu.core_type<tc>, window_params = [{transform_indices = @transform_0, window_bounds = array<i64: 2, 64>}, {transform_indices = @transform_1, window_bounds = array<i64: 2, 6>}, {pipeline_mode = #tpu.pipeline_mode<synchronous>, transform_indices = @transform_2, window_bounds = array<i64: 64, 128>}, {pipeline_mode = #tpu.pipeline_mode<synchronous>, transform_indices = @transform_3, window_bounds = array<i64: 1, 128>}, {pipeline_mode = #tpu.pipeline_mode<synchronous>, transform_indices = @transform_4, window_bounds = array<i64: 128, 128>}, {pipeline_mode = #tpu.pipeline_mode<synchronous>, transform_indices = @transform_5, window_bounds = array<i64: 1, 128>}, {pipeline_mode = #tpu.pipeline_mode<synchronous>, transform_indices = @transform_6, window_bounds = array<i64: 128, 12>}, {pipeline_mode = #tpu.pipeline_mode<synchronous>, transform_indices = @transform_7, window_bounds = array<i64: 1, 12>}, {transform_indices = @transform_8, window_bounds = array<i64: 2, 128>}]} {
    %c0 = arith.constant 0 : index
    %c0_0 = arith.constant 0 : index
    %0 = vector.load %arg1[%c0, %c0_0] : memref<2x64xf32, #tpu.memory_space<vmem>>, vector<2x64xf32>
    %c0_1 = arith.constant 0 : index
    %c0_2 = arith.constant 0 : index
    %1 = vector.load %arg3[%c0_1, %c0_2] : memref<64x128xf32, #tpu.memory_space<vmem>>, vector<64x128xf32>
    %cst = arith.constant dense<0.000000e+00> : vector<2x128xf32>
    %2 = tpu.matmul %0, %1, %cst {dimension_numbers = #tpu.dot_dimension_numbers<[1], [0], [0], [1], [0, 0, 1, 1], [], []>} : vector<2x64xf32>, vector<64x128xf32>, vector<2x128xf32> -> vector<2x128xf32>
    %c0_3 = arith.constant 0 : index
    %c0_4 = arith.constant 0 : index
    %3 = vector.load %arg4[%c0_3, %c0_4] : memref<1x128xf32, #tpu.memory_space<vmem>>, vector<1x128xf32>
    %4 = vector.broadcast %3 : vector<1x128xf32> to vector<2x128xf32>
    %5 = arith.addf %2, %4 : vector<2x128xf32>
    %cst_5 = arith.constant 0.000000e+00 : f32
    %6 = vector.broadcast %cst_5 : f32 to vector<2x128xf32>
    %7 = arith.maximumf %5, %6 : vector<2x128xf32>
    %c0_6 = arith.constant 0 : index
    %c0_7 = arith.constant 0 : index
    %8 = vector.load %arg5[%c0_6, %c0_7] : memref<128x128xf32, #tpu.memory_space<vmem>>, vector<128x128xf32>
    %cst_8 = arith.constant dense<0.000000e+00> : vector<2x128xf32>
    %9 = tpu.matmul %7, %8, %cst_8 {dimension_numbers = #tpu.dot_dimension_numbers<[1], [0], [0], [1], [0, 0, 1, 1], [], []>} : vector<2x128xf32>, vector<128x128xf32>, vector<2x128xf32> -> vector<2x128xf32>
    %c0_9 = arith.constant 0 : index
    %c0_10 = arith.constant 0 : index
    %10 = vector.load %arg6[%c0_9, %c0_10] : memref<1x128xf32, #tpu.memory_space<vmem>>, vector<1x128xf32>
    %11 = vector.broadcast %10 : vector<1x128xf32> to vector<2x128xf32>
    %12 = arith.addf %9, %11 : vector<2x128xf32>
    %cst_11 = arith.constant 0.000000e+00 : f32
    %13 = vector.broadcast %cst_11 : f32 to vector<2x128xf32>
    %14 = arith.maximumf %12, %13 : vector<2x128xf32>
    %c0_12 = arith.constant 0 : index
    %c0_13 = arith.constant 0 : index
    %15 = vector.load %arg7[%c0_12, %c0_13] : memref<128x12xf32, #tpu.memory_space<vmem>>, vector<128x12xf32>
    %cst_14 = arith.constant dense<0.000000e+00> : vector<2x12xf32>
    %16 = tpu.matmul %14, %15, %cst_14 {dimension_numbers = #tpu.dot_dimension_numbers<[1], [0], [0], [1], [0, 0, 1, 1], [], []>} : vector<2x128xf32>, vector<128x12xf32>, vector<2x12xf32> -> vector<2x12xf32>
    %c0_15 = arith.constant 0 : index
    %c0_16 = arith.constant 0 : index
    %17 = vector.load %arg8[%c0_15, %c0_16] : memref<1x12xf32, #tpu.memory_space<vmem>>, vector<1x12xf32>
    %18 = vector.broadcast %17 : vector<1x12xf32> to vector<2x12xf32>
    %19 = arith.addf %16, %18 : vector<2x12xf32>
    %20 = vector.extract_strided_slice %19 {offsets = [0, 0], sizes = [2, 6], strides = [1, 1]} : vector<2x12xf32> to vector<2x6xf32>
    %21 = vector.extract_strided_slice %19 {offsets = [0, 6], sizes = [2, 6], strides = [1, 1]} : vector<2x12xf32> to vector<2x6xf32>
    %22 = math.tanh %21 : vector<2x6xf32>
    %cst_17 = arith.constant 1.000000e+00 : f32
    %23 = vector.broadcast %cst_17 : f32 to vector<2x6xf32>
    %24 = arith.addf %22, %23 : vector<2x6xf32>
    %cst_18 = arith.constant 6.000000e+00 : f32
    %25 = vector.broadcast %cst_18 : f32 to vector<2x6xf32>
    %26 = arith.mulf %25, %24 : vector<2x6xf32>
    %cst_19 = arith.constant -1.000000e+01 : f32
    %27 = vector.broadcast %cst_19 : f32 to vector<2x6xf32>
    %28 = arith.addf %27, %26 : vector<2x6xf32>
    %29 = math.exp %28 : vector<2x6xf32>
    %c0_20 = arith.constant 0 : index
    %c0_21 = arith.constant 0 : index
    %30 = vector.load %arg2[%c0_20, %c0_21] : memref<2x6xf32, #tpu.memory_space<vmem>>, vector<2x6xf32>
    %31 = arith.mulf %30, %29 : vector<2x6xf32>
    %32 = arith.addf %20, %31 : vector<2x6xf32>
    %cst_22 = arith.constant -5.000000e-01 : f32
    %33 = vector.broadcast %cst_22 : f32 to vector<2x6xf32>
    %34 = arith.mulf %33, %30 : vector<2x6xf32>
    %35 = arith.mulf %34, %30 : vector<2x6xf32>
    %36 = arith.subf %35, %28 : vector<2x6xf32>
    %cst_23 = arith.constant dense<0.000000e+00> : vector<2xf32>
    %37 = vector.multi_reduction <add>, %36, %cst_23 [1] : vector<2x6xf32> to vector<2xf32>
    %38 = vector.shape_cast %37 : vector<2xf32> to vector<2x1xf32>
    %cst_24 = arith.constant 5.51363134 : f32
    %39 = vector.broadcast %cst_24 : f32 to vector<2x1xf32>
    %40 = arith.subf %38, %39 : vector<2x1xf32>
    %41 = math.tanh %20 : vector<2x6xf32>
    %42 = math.tanh %32 : vector<2x6xf32>
    %43 = arith.mulf %42, %42 : vector<2x6xf32>
    %cst_25 = arith.constant 1.000000e+00 : f32
    %44 = vector.broadcast %cst_25 : f32 to vector<2x6xf32>
    %45 = arith.subf %44, %43 : vector<2x6xf32>
    %cst_26 = arith.constant 0.000000e+00 : f32
    %46 = vector.broadcast %cst_26 : f32 to vector<2x6xf32>
    %47 = arith.maximumf %45, %46 : vector<2x6xf32>
    %cst_27 = arith.constant 9.99999997E-7 : f32
    %48 = vector.broadcast %cst_27 : f32 to vector<2x6xf32>
    %49 = arith.addf %47, %48 : vector<2x6xf32>
    %50 = math.log %49 : vector<2x6xf32>
    %cst_28 = arith.constant dense<0.000000e+00> : vector<2xf32>
    %51 = vector.multi_reduction <add>, %50, %cst_28 [1] : vector<2x6xf32> to vector<2xf32>
    %52 = vector.shape_cast %51 : vector<2xf32> to vector<2x1xf32>
    %53 = arith.subf %40, %52 : vector<2x1xf32>
    %cst_29 = arith.constant 0.000000e+00 : f32
    %54 = vector.broadcast %cst_29 : f32 to vector<2x109xf32>
    %55 = tpu.concatenate %41, %42, %28, %53, %54 in 1 : vector<2x6xf32>, vector<2x6xf32>, vector<2x6xf32>, vector<2x1xf32>, vector<2x109xf32> -> vector<2x128xf32>
    %c0_30 = arith.constant 0 : index
    %c0_31 = arith.constant 0 : index
    %56 = vector.load %arg9[%c0_30, %c0_31] : memref<2x128xf32, #tpu.memory_space<vmem>>, vector<2x128xf32>
    tpu.vector_store %arg9[%c0_30, %c0_31], %55 {strides = array<i32>} : memref<2x128xf32, #tpu.memory_space<vmem>>, vector<2x128xf32>,
    return
  }
  func.func @transform_0(%arg0: i32) -> (i32, i32) {
    %c0_i32 = arith.constant 0 : i32
    %c0_i32_0 = arith.constant 0 : i32
    return %arg0, %c0_i32 : i32, i32
  }
  func.func @transform_1(%arg0: i32) -> (i32, i32) {
    %c0_i32 = arith.constant 0 : i32
    %c0_i32_0 = arith.constant 0 : i32
    return %arg0, %c0_i32 : i32, i32
  }
  func.func @transform_2(%arg0: i32) -> (i32, i32) {
    %c0_i32 = arith.constant 0 : i32
    %c0_i32_0 = arith.constant 0 : i32
    %c0_i32_1 = arith.constant 0 : i32
    return %c0_i32, %c0_i32_0 : i32, i32
  }
  func.func @transform_3(%arg0: i32) -> (i32, i32) {
    %c0_i32 = arith.constant 0 : i32
    %c0_i32_0 = arith.constant 0 : i32
    %c0_i32_1 = arith.constant 0 : i32
    return %c0_i32, %c0_i32_0 : i32, i32
  }
  func.func @transform_4(%arg0: i32) -> (i32, i32) {
    %c0_i32 = arith.constant 0 : i32
    %c0_i32_0 = arith.constant 0 : i32
    %c0_i32_1 = arith.constant 0 : i32
    return %c0_i32, %c0_i32_0 : i32, i32
  }
  func.func @transform_5(%arg0: i32) -> (i32, i32) {
    %c0_i32 = arith.constant 0 : i32
    %c0_i32_0 = arith.constant 0 : i32
    %c0_i32_1 = arith.constant 0 : i32
    return %c0_i32, %c0_i32_0 : i32, i32
  }
  func.func @transform_6(%arg0: i32) -> (i32, i32) {
    %c0_i32 = arith.constant 0 : i32
    %c0_i32_0 = arith.constant 0 : i32
    %c0_i32_1 = arith.constant 0 : i32
    return %c0_i32, %c0_i32_0 : i32, i32
  }
  func.func @transform_7(%arg0: i32) -> (i32, i32) {
    %c0_i32 = arith.constant 0 : i32
    %c0_i32_0 = arith.constant 0 : i32
    %c0_i32_1 = arith.constant 0 : i32
    return %c0_i32, %c0_i32_0 : i32, i32
  }
  func.func @transform_8(%arg0: i32) -> (i32, i32) {
    %c0_i32 = arith.constant 0 : i32
    %c0_i32_0 = arith.constant 0 : i32
    return %arg0, %c0_i32 : i32, i32
  }
}

</mosaic_0001>

<llo_original>
// kernel: tpu_custom_call.1
$region0: #{tpu_custom_call.1}
  #allocation0 [shape = 'u32[]', space=smem, size = 0x4, offset = 0x4, fixed_abs, tag = 'smem constant byte address 0x4 - core index']
  #allocation1 [shape = 'u32[72,128]{1,0:T(1,128)}', space=vmem, size = 0x9000, scoped, tag = 'internal scratch']
  %s0 = inlined_call_operand.vmem [shape: f32[2,64], index: 0, kind: input, shape index: {}]
  %s1 = inlined_call_operand.vmem [shape: f32[2,6], index: 1, kind: input, shape index: {}]
  %s2 = inlined_call_operand.hbm [shape: f32[64,128], index: 2, kind: input, shape index: {}]
  %s3 = inlined_call_operand.vmem [shape: f32[1,128], index: 3, kind: input, shape index: {}]
  %s4 = inlined_call_operand.vmem [shape: f32[128,128], index: 4, kind: input, shape index: {}]
  %s5 = inlined_call_operand.vmem [shape: f32[1,128], index: 5, kind: input, shape index: {}]
  %s6 = inlined_call_operand.vmem [shape: f32[128,12], index: 6, kind: input, shape index: {}]
  %s7 = inlined_call_operand.vmem [shape: f32[1,12], index: 7, kind: input, shape index: {}]
  %s8 = inlined_call_operand.hbm [shape: f32[2,128], index: 8, kind: output, shape index: {}]
  %s9 = sld [smem:[#allocation0]]
  $region46: #{tpu_custom_call.1} parent=0
    _
  %s11 = ssub.s32 1, %s9
  %s12 = scalar_select 0, %s11, %s9
  $region1: #{tpu_custom_call.1} parent=0
    #allocation2 [shape = 'u8[32768]{0}', space=vmem, size = 0x8000, scoped, tag = 'input window, operand 2, single buffered']
    #allocation3 [shape = 's32[1]{0}', space=sflag, size = 0x4, scoped, tag = 'scoped memory for tpu_custom_call.1']
    #allocation4 [shape = 's32[1]{0}', space=sflag, size = 0x4, scoped, tag = 'scoped memory for tpu_custom_call.1']
    #allocation5 [shape = 'u8[1024]{0}', space=vmem, size = 0x400, scoped, tag = 'output window, operand 0, single buffered']
    %13 = vsyncpa [#allocation3], 0
    %14 = vsyncpa [#allocation4], 0
    // Predicated region
    $region2: #{tpu_custom_call.1} parent=1 // pred_check
      _
    $region3: #{tpu_custom_call.1} parent=1 // pred_check_branch
      %16 = sbr.rel (0) target = $region5
    $region4: #{tpu_custom_call.1} parent=1 // pred_region
      _
    $region5: #{tpu_custom_call.1} parent=1 // pred_fallthru
      _
    // Predicated region
    $region6: #{tpu_custom_call.1} parent=1 // pred_check
      _
    $region7: #{tpu_custom_call.1} parent=1 // pred_check_branch
      %18 = sbr.rel (0) target = $region9
    $region8: #{tpu_custom_call.1} parent=1 // pred_region
      _
    $region9: #{tpu_custom_call.1} parent=1 // pred_fallthru
      _
    // Predicated region
    $region10: #{tpu_custom_call.1} parent=1 // pred_check
      _
    $region11: #{tpu_custom_call.1} parent=1 // pred_check_branch
      %20 = sbr.rel (0) target = $region13
    $region12: #{tpu_custom_call.1} parent=1 // pred_region
      %22 = vsyncadd [#allocation3], 0
      %s23 = sshll.u32 %s2, 4
      %s24 = int_to_ptr.hbm [resolvable:$true] %s23
      %s25 = sshll.u32 [#allocation2], 4
      %s26 = int_to_ptr.vmem [resolvable:$true] %s25
      %31 = dma.hbm_to_vmem [thread:$0]  %s24, 1024, %s26, [#allocation3], 128, 128, 8
    $region13: #{tpu_custom_call.1} parent=1 // pred_fallthru
      _
    // Predicated region
    $region14: #{tpu_custom_call.1} parent=1 // pred_check
      _
    $region15: #{tpu_custom_call.1} parent=1 // pred_check_branch
      %33 = sbr.rel (0) target = $region17
    $region16: #{tpu_custom_call.1} parent=1 // pred_region
      _
    $region17: #{tpu_custom_call.1} parent=1 // pred_fallthru
      _
    // Predicated region
    $region18: #{tpu_custom_call.1} parent=1 // pred_check
      _
    $region19: #{tpu_custom_call.1} parent=1 // pred_check_branch
      %35 = sbr.rel (0) target = $region21
    $region20: #{tpu_custom_call.1} parent=1 // pred_region
      _
    $region21: #{tpu_custom_call.1} parent=1 // pred_fallthru
      _
    // Predicated region
    $region22: #{tpu_custom_call.1} parent=1 // pred_check
      _
    $region23: #{tpu_custom_call.1} parent=1 // pred_check_branch
      %37 = sbr.rel (0) target = $region25
    $region24: #{tpu_custom_call.1} parent=1 // pred_region
      _
    $region25: #{tpu_custom_call.1} parent=1 // pred_fallthru
      _
    // Predicated region
    $region26: #{tpu_custom_call.1} parent=1 // pred_check
      _
    $region27: #{tpu_custom_call.1} parent=1 // pred_check_branch
      %39 = sbr.rel (0) target = $region29
    $region28: #{tpu_custom_call.1} parent=1 // pred_region
      _
    $region29: #{tpu_custom_call.1} parent=1 // pred_fallthru
      _
    // Predicated region
    $region30: #{tpu_custom_call.1} parent=1 // pred_check
      _
    $region31: #{tpu_custom_call.1} parent=1 // pred_check_branch
      %41 = sbr.rel (0) target = $region33
    $region32: #{tpu_custom_call.1} parent=1 // pred_region
      _
    $region33: #{tpu_custom_call.1} parent=1 // pred_fallthru
      _
    // Predicated region
    $region34: #{tpu_custom_call.1} parent=1 // pred_check
      _
    $region35: #{tpu_custom_call.1} parent=1 // pred_check_branch
      %43 = sbr.rel (0) target = $region37
    $region36: #{tpu_custom_call.1} parent=1 // pred_region
      %45 = dma.done [#allocation3], 1024
    $region37: #{tpu_custom_call.1} parent=1 // pred_fallthru
      _
    %v46 = vld [vmem:[%s0] sm:$0x3]
    %v47 = vld [vmem:[#allocation2] sm:$0xff]
    %v48 = vld [vmem:[#allocation2 + $0x8] sm:$0xff]
    %v49 = vld [vmem:[#allocation2 + $0x10] sm:$0xff]
    %v50 = vld [vmem:[#allocation2 + $0x18] sm:$0xff]
    %v51 = vld [vmem:[#allocation2 + $0x20] sm:$0xff]
    %v52 = vld [vmem:[#allocation2 + $0x28] sm:$0xff]
    %v53 = vld [vmem:[#allocation2 + $0x30] sm:$0xff]
    %v54 = vld [vmem:[#allocation2 + $0x38] sm:$0xff]
    %v55 = vld [vmem:[%s3] sm:$0x1]
    %v57 = vperm.slane %v55, 0
    %vm59 = vcmask 523264
    %v61 = vsel %vm59, %v46, 0
    %63 = vmatpush.msra.mxu0 0.0
    %64 = vmatpush.msra.mxu0 0.0
    %65 = vmatpush.msra.mxu0 0.0
    %66 = vmatpush.msra.mxu0 0.0
    %67 = vmatpush.msra.mxu0 0.0
    %68 = vmatpush.msra.mxu0 0.0
    %69 = vmatpush.msra.mxu0 0.0
    %70 = vmatpush.msra.mxu0 0.0
    %71 = vmatpush.msra.mxu0 %v54
    %72 = vmatpush.msra.mxu0 %v53
    %73 = vmatpush.msra.mxu0 %v52
    %74 = vmatpush.msra.mxu0 %v51
    %75 = vmatpush.msra.mxu0 %v50
    %76 = vmatpush.msra.mxu0 %v49
    %77 = vmatpush.msra.mxu0 %v48
    %78 = vmatpush.msra.mxu0 %v47
    %79 = vmatmul.f32.gmra.mxu0 %v61
    %v80 = vpop.f32.mrf.mxu0
    %v81 = vadd.f32 %v57, %v80
    %82 = vdwg.mxu0
    %v83 = vmax.f32 %v81, 0.0
    %v84 = vld [vmem:[%s4] sm:$0xff]
    %v85 = vld [vmem:[%s4 + $0x8] sm:$0xff]
    %v86 = vld [vmem:[%s4 + $0x10] sm:$0xff]
    %v87 = vld [vmem:[%s4 + $0x18] sm:$0xff]
    %v88 = vld [vmem:[%s4 + $0x20] sm:$0xff]
    %v89 = vld [vmem:[%s4 + $0x28] sm:$0xff]
    %v90 = vld [vmem:[%s4 + $0x30] sm:$0xff]
    %v91 = vld [vmem:[%s4 + $0x38] sm:$0xff]
    %v92 = vld [vmem:[%s4 + $0x40] sm:$0xff]
    %v93 = vld [vmem:[%s4 + $0x48] sm:$0xff]
    %v94 = vld [vmem:[%s4 + $0x50] sm:$0xff]
    %v95 = vld [vmem:[%s4 + $0x58] sm:$0xff]
    %v96 = vld [vmem:[%s4 + $0x60] sm:$0xff]
    %v97 = vld [vmem:[%s4 + $0x68] sm:$0xff]
    %v98 = vld [vmem:[%s4 + $0x70] sm:$0xff]
    %v99 = vld [vmem:[%s4 + $0x78] sm:$0xff]
    %v100 = vld [vmem:[%s5] sm:$0x1]
    %v102 = vperm.slane %v100, 0
    %104 = vmatpush.msra.mxu0 %v99
    %105 = vmatpush.msra.mxu0 %v98
    %106 = vmatpush.msra.mxu0 %v97
    %107 = vmatpush.msra.mxu0 %v96
    %108 = vmatpush.msra.mxu0 %v95
    %109 = vmatpush.msra.mxu0 %v94
    %110 = vmatpush.msra.mxu0 %v93
    %111 = vmatpush.msra.mxu0 %v92
    %112 = vmatpush.msra.mxu0 %v91
    %113 = vmatpush.msra.mxu0 %v90
    %114 = vmatpush.msra.mxu0 %v89
    %115 = vmatpush.msra.mxu0 %v88
    %116 = vmatpush.msra.mxu0 %v87
    %117 = vmatpush.msra.mxu0 %v86
    %118 = vmatpush.msra.mxu0 %v85
    %119 = vmatpush.msra.mxu0 %v84
    %120 = vmatmul.f32.gmra.mxu0 %v83
    %v121 = vpop.f32.mrf.mxu0
    %v122 = vadd.f32 %v102, %v121
    %123 = vdwg.mxu0
    %v124 = vmax.f32 %v122, 0.0
    %v125 = vld [vmem:[%s6] sm:$0xff]
    %v126 = vld [vmem:[%s6 + $0x8] sm:$0xff]
    %v127 = vld [vmem:[%s6 + $0x10] sm:$0xff]
    %v128 = vld [vmem:[%s6 + $0x18] sm:$0xff]
    %v129 = vld [vmem:[%s6 + $0x20] sm:$0xff]
    %v130 = vld [vmem:[%s6 + $0x28] sm:$0xff]
    %v131 = vld [vmem:[%s6 + $0x30] sm:$0xff]
    %v132 = vld [vmem:[%s6 + $0x38] sm:$0xff]
    %v133 = vld [vmem:[%s6 + $0x40] sm:$0xff]
    %v134 = vld [vmem:[%s6 + $0x48] sm:$0xff]
    %v135 = vld [vmem:[%s6 + $0x50] sm:$0xff]
    %v136 = vld [vmem:[%s6 + $0x58] sm:$0xff]
    %v137 = vld [vmem:[%s6 + $0x60] sm:$0xff]
    %v138 = vld [vmem:[%s6 + $0x68] sm:$0xff]
    %v139 = vld [vmem:[%s6 + $0x70] sm:$0xff]
    %v140 = vld [vmem:[%s6 + $0x78] sm:$0xff]
    %v141 = vld [vmem:[%s7] sm:$0x1]
    %v143 = vperm.slane %v141, 0
    %145 = vmatpush.msra.mxu0 %v140
    %146 = vmatpush.msra.mxu0 %v139
    %147 = vmatpush.msra.mxu0 %v138
    %148 = vmatpush.msra.mxu0 %v137
    %149 = vmatpush.msra.mxu0 %v136
    %150 = vmatpush.msra.mxu0 %v135
    %151 = vmatpush.msra.mxu0 %v134
    %152 = vmatpush.msra.mxu0 %v133
    %153 = vmatpush.msra.mxu0 %v132
    %154 = vmatpush.msra.mxu0 %v131
    %155 = vmatpush.msra.mxu0 %v130
    %156 = vmatpush.msra.mxu0 %v129
    %157 = vmatpush.msra.mxu0 %v128
    %158 = vmatpush.msra.mxu0 %v127
    %159 = vmatpush.msra.mxu0 %v126
    %160 = vmatpush.msra.mxu0 %v125
    %161 = vmatmul.f32.gmra.mxu0 %v124
    %v162 = vpop.f32.mrf.mxu0
    %v163 = vadd.f32 %v143, %v162
    %164 = vdwg.mxu0
    %v165 = vtanh.pop %v163
    %v166 = vadd.f32 %v165, 1.0
    %v167 = vmul.f32 %v166, 6.0
    %v168 = vadd.f32 %v167, -10.0
    %v169 = vmul.f32 %v168, 1.442695
    %v170 = vpow.pop %v169
    %v171 = vld [vmem:[%s1] sm:$0x3]
    %173 = vrot.lane.b32.xlu0 %v170, 122
    %v174 = vpop.permute.xlu0 %173
    %v176 = vmul.f32 %v171, %v174
    %v177 = vadd.f32 %v163, %v176
    %v178 = vmul.f32 %v171, -0.5
    %v179 = vmul.f32 %v178, %v171
    %181 = vrot.lane.b32.xlu0 %v168, 122
    %v182 = vpop.permute.xlu0 %181
    %v184 = vsub.f32 %v179, %v182
    %vm185 = vcmask 41984
    %v186 = vsel %vm185, %v184, 0.0
    %187 = vadd.xlane.f32.xlu0 %v186
    %v188 = vpop.xlane.xlu0 %187
    %v189 = vsub.f32 %v188, 5.5136313
    %v190 = vtanh.pop %v177
    %v191 = vmul.f32 %v190, %v190
    %v192 = vsub.f32 1.0, %v191
    %v193 = vmax.f32 %v192, 0.0
    %v194 = vadd.f32 %v193, 1e-06
    %v195 = vlog2.pop %v194
    %v196 = vmul.f32 %v195, 0.6931472
    %v197 = vsel %vm185, %v196, 0.0
    %198 = vadd.xlane.f32.xlu0 %v197
    %v199 = vpop.xlane.xlu0 %198
    %v200 = vsub.f32 %v189, %v199
    %202 = vrot.lane.b32.xlu0 %v190, 6
    %v203 = vpop.permute.xlu0 %202
    %205 = vrot.lane.b32.xlu0 %v168, 6
    %v206 = vpop.permute.xlu0 %205
    %vm208 = vcmask 48128
    %v209 = vsel %vm208, %v165, %v203
    %vm210 = vcmask 97280
    %v211 = vsel %vm210, %v209, %v206
    %vm212 = vcmask 146432
    %v213 = vsel %vm212, %v211, %v200
    %vm214 = vcmask 154624
    %v215 = vsel %vm214, %v213, 0.0
    %216 = vst [vmem:[#allocation5] sm:$0x3] %v215
    // Predicated region
    $region38: #{tpu_custom_call.1} parent=1 // pred_check
      _
    $region39: #{tpu_custom_call.1} parent=1 // pred_check_branch
      %218 = sbr.rel (0) target = $region41
    $region40: #{tpu_custom_call.1} parent=1 // pred_region
      %220 = vsyncadd [#allocation4], 0
      %s222 = sshll.u32 [#allocation5], 4
      %s223 = int_to_ptr.vmem [resolvable:$true] %s222
      %s224 = sshll.u32 %s8, 4
      %s225 = int_to_ptr.hbm [resolvable:$true] %s224
      %227 = dma.vmem_to_hbm [thread:$0]  %s223, 32, %s225, [#allocation4]
    $region41: #{tpu_custom_call.1} parent=1 // pred_fallthru
      _
    // Predicated region
    $region42: #{tpu_custom_call.1} parent=1 // pred_check
      _
    $region43: #{tpu_custom_call.1} parent=1 // pred_check_branch
      %229 = sbr.rel (0) target = $region45
    $region44: #{tpu_custom_call.1} parent=1 // pred_region
      %231 = dma.done [#allocation4], 32
    $region45: #{tpu_custom_call.1} parent=1 // pred_fallthru
      _
    %232 = vsyncpa [#allocation3], 1
    %233 = vsyncpa [#allocation4], 1

</llo_original>
